<compile_context>
chip_gen: v7x
topology: tpu7x:2x2x1
jax: 0.10.0
libtpu: 0.0.40
codegen_flags: <defaults>
</compile_context>

<pallas_src>
import functools
import math

import jax
import jax.numpy as jnp
from jax.experimental import pallas as pl
from jax.experimental.pallas import tpu as pltpu


NEG_INF = -1e30  # large finite negative: NaN-safe masking


def _vmem_limit_bytes():
    # Re-derive per generation: leave headroom under v7x's 64 MiB physical VMEM,
    # use more of v5e / v6e's 128 MiB.
    try:
        cap = pltpu.get_tpu_info().vmem_capacity_bytes
        return int(min(96 * 1024 * 1024, int(cap * 0.7)))
    except Exception:
        return 32 * 1024 * 1024


# --------------------------------------------------------------------------------------
# Phase 0: fused Q / [K;V] projection + RoPE, one pass over the tokens per head.
# --------------------------------------------------------------------------------------
def _proj_rope_kernel(x_ref, wq_ref, wkv_ref, cs_ref, q_out, k_out, v_out,
                      *, head_dim, scale):
    hd = head_dim
    hd2 = hd // 2
    x = x_ref[...]                                             # (ts, D) bf16
    # (ts, D) x (hd, D) and (ts, D) x (2hd, D), contracting D -> f32 accumulation on the MXU.
    q = jax.lax.dot_general(x, wq_ref[...], (((1,), (1,)), ((), ())),
                            preferred_element_type=jnp.float32)
    kv = jax.lax.dot_general(x, wkv_ref[...], (((1,), (1,)), ((), ())),
                             preferred_element_type=jnp.float32)
    c = cs_ref[:, :hd2]                                        # packed [cos | sin] f32
    s = cs_ref[:, hd2:]

    qe, qo = q[:, :hd2], q[:, hd2:]
    k = kv[:, :hd]
    v = kv[:, hd:]
    ke, ko = k[:, :hd2], k[:, hd2:]

    q_rot = jnp.concatenate([qe * c - qo * s, qo * c + qe * s], axis=-1) * scale
    k_rot = jnp.concatenate([ke * c - ko * s, ko * c + ke * s], axis=-1)

    q_out[0, :, :] = q_rot.astype(q_out.dtype)                 # bf16, pre-scaled
    k_out[0, :, :] = k_rot.astype(k_out.dtype)
    v_out[0, :, :] = v.astype(v_out.dtype)


# --------------------------------------------------------------------------------------
# Phase 1: flash attention over a triangular (qi, ki<=qi) schedule (scalar-prefetched).
# --------------------------------------------------------------------------------------
def _flash_kernel(qi_map_ref, ki_map_ref, q_ref, k_ref, v_ref, o_ref,
                  m_scr, l_scr, acc_scr, s_scr, *, tq, tk):
    p = pl.program_id(1)
    qi = qi_map_ref[p]
    ki = ki_map_ref[p]

    # New q tile: reset online-softmax state (ki == 0 is always the first pair for a q tile).
    @pl.when(ki == 0)
    def _init():
        m_scr[...] = jnp.full_like(m_scr, -jnp.inf)
        l_scr[...] = jnp.zeros_like(l_scr)
        acc_scr[...] = jnp.zeros_like(acc_scr)

    q = q_ref[0]                                               # (tq, hd) bf16, pre-scaled
    k = k_ref[0]                                               # (tk, hd) bf16
    s = jax.lax.dot_general(q, k, (((1,), (1,)), ((), ())),
                            preferred_element_type=jnp.float32)  # (tq, tk) f32
    s_scr[...] = s

    # Causal mask only on the diagonal tile (tq == tk => local indices suffice).
    @pl.when(ki == qi)
    def _mask():
        rows = jax.lax.broadcasted_iota(jnp.int32, (tq, tk), 0)
        cols = jax.lax.broadcasted_iota(jnp.int32, (tq, tk), 1)
        s_scr[...] = jnp.where(cols <= rows, s_scr[...], NEG_INF)

    scores = s_scr[...]
    m_prev = m_scr[...]
    m_new = jnp.maximum(m_prev, jnp.max(scores, axis=-1, keepdims=True))
    alpha = jnp.exp(m_prev - m_new)
    pexp = jnp.exp(scores - m_new)
    l_scr[...] = alpha * l_scr[...] + jnp.sum(pexp, axis=-1, keepdims=True)
    acc_scr[...] = alpha * acc_scr[...] + jax.lax.dot_general(
        pexp.astype(jnp.bfloat16), v_ref[0], (((1,), (0,)), ((), ())),
        preferred_element_type=jnp.float32)
    m_scr[...] = m_new

    # Diagonal tile is the last kv tile visited for this q tile -> finalize.
    @pl.when(ki == qi)
    def _finalize():
        inv_l = pl.reciprocal(l_scr[...], approx=True)         # EUP slot, ~free
        o_ref[0, :, :] = (acc_scr[...] * inv_l).astype(o_ref.dtype)


# --------------------------------------------------------------------------------------
# Phase 2: tiled output projection, reducing over heads into an f32 accumulator.
# --------------------------------------------------------------------------------------
def _out_proj_kernel(ctx_ref, wo_ref, o_ref, acc_scr):
    h = pl.program_id(2)

    @pl.when(h == 0)
    def _init():
        acc_scr[...] = jnp.zeros_like(acc_scr)

    acc_scr[...] += jax.lax.dot_general(
        ctx_ref[0], wo_ref[0], (((1,), (0,)), ((), ())),
        preferred_element_type=jnp.float32)

    @pl.when(h == pl.num_programs(2) - 1)
    def _fin():
        o_ref[...] = acc_scr[...].astype(o_ref.dtype)


def attention_forward(x, wq, wk, wv, wo, cos, sin, *, n_heads, head_dim,
                      block_q=None, block_k=None):
    """x: (S, D) float32; cos/sin: (S, head_dim//2). Returns (S, D) float32."""
    S, D = x.shape
    hd = head_dim
    hd2 = hd // 2
    H = n_heads * hd
    assert hd % 2 == 0 and hd % 8 == 0, "head_dim must be even and a multiple of 8"
    tq = block_q or min(S, 128)
    tk = block_k or tq
    assert tq == tk, "triangular causal schedule requires square tiles"
    assert S % tq == 0
    nq = S // tq
    n_pairs = nq * (nq + 1) // 2
    vmem_limit = _vmem_limit_bytes()
    scale = 1.0 / math.sqrt(hd)

    # ---- host-side, one-time layout transforms (all matmul operands bf16 end-to-end) ----
    xb = x.astype(jnp.bfloat16)
    # Per-head "evens first, odds second" permutation so RoPE is pure element-wise math.
    perm = jnp.concatenate([jnp.arange(0, hd, 2), jnp.arange(1, hd, 2)])
    wq_p = wq.reshape(n_heads, hd, D)[:, perm, :].reshape(H, D).astype(jnp.bfloat16)
    wk_p = wk.reshape(n_heads, hd, D)[:, perm, :]
    wv_h = wv.reshape(n_heads, hd, D)
    wkv = jnp.concatenate([wk_p, wv_h], axis=1).reshape(n_heads * 2 * hd, D).astype(jnp.bfloat16)
    cs = jnp.concatenate([cos, sin], axis=-1)                  # packed (S, hd) f32, one stream
    wo_t = jnp.transpose(wo, (1, 0)).reshape(n_heads, hd, D).astype(jnp.bfloat16)

    # ---- Phase 0: Q/K/V projection + RoPE, bf16 outputs in (n_heads, S, hd) layout ----
    q_rot, k_rot, v_h = pl.pallas_call(
        functools.partial(_proj_rope_kernel, head_dim=hd, scale=scale),
        out_shape=(jax.ShapeDtypeStruct((n_heads, S, hd), jnp.bfloat16),
                   jax.ShapeDtypeStruct((n_heads, S, hd), jnp.bfloat16),
                   jax.ShapeDtypeStruct((n_heads, S, hd), jnp.bfloat16)),
        grid_spec=pltpu.PrefetchScalarGridSpec(
            num_scalar_prefetch=0,
            grid=(nq, n_heads),          # heads innermost -> x tile DMA'd once per seq tile
            in_specs=[
                pl.BlockSpec((tq, D), lambda i, h: (i, 0)),        # x rows
                pl.BlockSpec((hd, D), lambda i, h: (h, 0)),        # wq rows of head h
                pl.BlockSpec((2 * hd, D), lambda i, h: (h, 0)),    # [wk; wv] rows of head h
                pl.BlockSpec((tq, hd), lambda i, h: (i, 0)),       # packed [cos|sin]
            ],
            out_specs=[
                pl.BlockSpec((1, tq, hd), lambda i, h: (h, i, 0)),
                pl.BlockSpec((1, tq, hd), lambda i, h: (h, i, 0)),
                pl.BlockSpec((1, tq, hd), lambda i, h: (h, i, 0)),
            ],
        ),
        compiler_params=pltpu.CompilerParams(
            dimension_semantics=("parallel", "parallel"),
            vmem_limit_bytes=vmem_limit),
        cost_estimate=pl.CostEstimate(
            flops=int(2 * S * D * 3 * H), transcendentals=0,
            bytes_accessed=int(2 * (x.size + wq_p.size + wkv.size + 3 * n_heads * S * hd)
                               + 4 * cs.size)),
    )(xb, wq_p, wkv, cs)

    # ---- Phase 1: flash attention over the triangular (qi, ki) schedule ----
    qi_ids, ki_ids = [], []
    for q_i in range(nq):
        for k_i in range(q_i + 1):
            qi_ids.append(q_i)
            ki_ids.append(k_i)
    qi_map = jnp.asarray(qi_ids, dtype=jnp.int32)
    ki_map = jnp.asarray(ki_ids, dtype=jnp.int32)

    ctx = pl.pallas_call(
        functools.partial(_flash_kernel, tq=tq, tk=tk),
        out_shape=jax.ShapeDtypeStruct((n_heads, S, hd), jnp.bfloat16),
        grid_spec=pltpu.PrefetchScalarGridSpec(
            num_scalar_prefetch=2,
            grid=(n_heads, n_pairs),
            in_specs=[
                pl.BlockSpec((1, tq, hd), lambda h, p, qi_m, ki_m: (h, qi_m[p], 0)),
                pl.BlockSpec((1, tk, hd), lambda h, p, qi_m, ki_m: (h, ki_m[p], 0)),
                pl.BlockSpec((1, tk, hd), lambda h, p, qi_m, ki_m: (h, ki_m[p], 0)),
            ],
            out_specs=pl.BlockSpec((1, tq, hd), lambda h, p, qi_m, ki_m: (h, qi_m[p], 0)),
            scratch_shapes=[
                pltpu.VMEM((tq, 1), jnp.float32),    # running max
                pltpu.VMEM((tq, 1), jnp.float32),    # running sum
                pltpu.VMEM((tq, hd), jnp.float32),   # output accumulator
                pltpu.VMEM((tq, tk), jnp.float32),   # scores (for diagonal-only masking)
            ],
        ),
        compiler_params=pltpu.CompilerParams(
            dimension_semantics=("parallel", "arbitrary"),
            vmem_limit_bytes=vmem_limit),
        cost_estimate=pl.CostEstimate(
            flops=int(4 * n_heads * n_pairs * tq * tk * hd),
            transcendentals=int(n_heads * n_pairs * tq * tk),
            bytes_accessed=int(2 * n_heads * (3 * n_pairs * tq * hd + S * hd))),
    )(qi_map, ki_map, q_rot, k_rot, v_h)

    # ---- Phase 2: tiled wo projection, reducing over heads ----
    tn = min(D, 256)
    assert D % tn == 0
    nd = D // tn
    out = pl.pallas_call(
        _out_proj_kernel,
        out_shape=jax.ShapeDtypeStruct((S, D), jnp.float32),
        grid_spec=pltpu.PrefetchScalarGridSpec(
            num_scalar_prefetch=0,
            grid=(nq, nd, n_heads),
            in_specs=[
                pl.BlockSpec((1, tq, hd), lambda i, j, h: (h, i, 0)),
                pl.BlockSpec((1, hd, tn), lambda i, j, h: (h, 0, j)),
            ],
            out_specs=pl.BlockSpec((tq, tn), lambda i, j, h: (i, j)),
            scratch_shapes=[pltpu.VMEM((tq, tn), jnp.float32)],
        ),
        compiler_params=pltpu.CompilerParams(
            dimension_semantics=("parallel", "parallel", "arbitrary"),
            vmem_limit_bytes=vmem_limit),
        cost_estimate=pl.CostEstimate(
            flops=int(2 * S * H * D), transcendentals=0,
            bytes_accessed=int(2 * (n_heads * S * hd + H * D) + 4 * S * D)),
    )(ctx, wo_t)
    return out


def _reference_forward(x, wq, wk, wv, wo, cos, sin, *, n_heads, head_dim):
    """Pure-f32 JAX reference matching the torch module (start_pos=0, causal mask)."""
    S, D = x.shape
    hd = head_dim

    def rope(t):  # (S, n_heads, hd), interleaved (even, odd) pairs
        te = t[..., 0::2]
        to = t[..., 1::2]
        c = cos[:, None, :]
        s = sin[:, None, :]
        re = te * c - to * s
        im = te * s + to * c
        return jnp.stack([re, im], axis=-1).reshape(S, n_heads, hd)

    q = (x @ wq.T).reshape(S, n_heads, hd)
    k = (x @ wk.T).reshape(S, n_heads, hd)
    v = (x @ wv.T).reshape(S, n_heads, hd)
    q, k = rope(q), rope(k)
    mask = jnp.where(jnp.arange(S)[None, :] <= jnp.arange(S)[:, None], 0.0, -jnp.inf)
    scores = jnp.einsum("qhd,khd->hqk", q, k) / math.sqrt(hd) + mask[None]
    p = jax.nn.softmax(scores, axis=-1)
    ctx = jnp.einsum("hqk,khd->qhd", p, v).reshape(S, n_heads * hd)
    return ctx @ wo.T


if __name__ == "__main__":
    # Small, module-consistent shapes (multiple q/kv tiles to exercise the triangular schedule).
    dim = 32
    n_heads = 4
    head_dim = dim // n_heads   # 8 (even, multiple of 8)
    seq = 16
    bsz = 1                     # the torch module's KV-cache write requires bsz == 1
    rope_theta = 500000.0

    key = jax.random.PRNGKey(0)
    kx, kq, kk, kv, ko = jax.random.split(key, 5)
    x = jax.random.normal(kx, (bsz, seq, dim), jnp.float32)
    wq = jax.random.normal(kq, (n_heads * head_dim, dim), jnp.float32) * 0.05
    wk = jax.random.normal(kk, (n_heads * head_dim, dim), jnp.float32) * 0.05
    wv = jax.random.normal(kv, (n_heads * head_dim, dim), jnp.float32) * 0.05
    wo = jax.random.normal(ko, (dim, n_heads * head_dim), jnp.float32) * 0.05

    # Rotary angles (start_pos = 0): one value per (position, frequency) pair.
    inv_freq = 1.0 / (rope_theta ** (jnp.arange(0, head_dim, 2, dtype=jnp.float32) / head_dim))
    angles = jnp.arange(seq, dtype=jnp.float32)[:, None] * inv_freq[None, :]   # (S, hd/2)
    cos = jnp.cos(angles)
    sin = jnp.sin(angles)

    out2d = attention_forward(x[0], wq, wk, wv, wo, cos, sin,
                              n_heads=n_heads, head_dim=head_dim,
                              block_q=8, block_k=8)
    out = out2d[None]           # (bsz, seq, dim)
    jax.block_until_ready(out)

    ref = _reference_forward(x[0], wq, wk, wv, wo, cos, sin,
                             n_heads=n_heads, head_dim=head_dim)
    assert out.shape == (bsz, seq, dim)
    # bf16 MXU operands / bf16 intermediates (f32 accumulation) vs f32 reference -> loose tol.
    assert bool(jnp.allclose(out2d, ref, atol=2e-2, rtol=2e-2)), "mismatch vs reference"

    print("KERNEL_OK")
</pallas_src>

<mosaic_0001>
module attributes {stable_mosaic.version = 11 : i64} {
  func.func @_proj_rope_kernel(%arg0: i32, %arg1: i32, %arg2: memref<8x32xbf16, #tpu.memory_space<vmem>>, %arg3: memref<8x32xbf16, #tpu.memory_space<vmem>>, %arg4: memref<16x32xbf16, #tpu.memory_space<vmem>>, %arg5: memref<8x8xf32, #tpu.memory_space<vmem>>, %arg6: memref<1x8x8xbf16, #tpu.memory_space<vmem>>, %arg7: memref<1x8x8xbf16, #tpu.memory_space<vmem>>, %arg8: memref<1x8x8xbf16, #tpu.memory_space<vmem>>) attributes {dimension_semantics = [#tpu.dimension_semantics<parallel>, #tpu.dimension_semantics<parallel>], iteration_bounds = array<i64: 2, 4>, scalar_prefetch = 0 : i64, scratch_operands = 0 : i64, tpu.core_type = #tpu.core_type<tc>, window_params = [{transform_indices = @transform_0, window_bounds = array<i64: 8, 32>}, {transform_indices = @transform_1, window_bounds = array<i64: 8, 32>}, {transform_indices = @transform_2, window_bounds = array<i64: 16, 32>}, {transform_indices = @transform_3, window_bounds = array<i64: 8, 8>}, {transform_indices = @transform_4, window_bounds = array<i64: 1, 8, 8>}, {transform_indices = @transform_5, window_bounds = array<i64: 1, 8, 8>}, {transform_indices = @transform_6, window_bounds = array<i64: 1, 8, 8>}]} {
    %c0 = arith.constant 0 : index
    %c0_0 = arith.constant 0 : index
    %0 = vector.load %arg2[%c0, %c0_0] : memref<8x32xbf16, #tpu.memory_space<vmem>>, vector<8x32xbf16>
    %c0_1 = arith.constant 0 : index
    %c0_2 = arith.constant 0 : index
    %1 = vector.load %arg3[%c0_1, %c0_2] : memref<8x32xbf16, #tpu.memory_space<vmem>>, vector<8x32xbf16>
    %cst = arith.constant dense<0.000000e+00> : vector<8x8xf32>
    %2 = tpu.matmul %0, %1, %cst {dimension_numbers = #tpu.dot_dimension_numbers<[1], [1], [0], [0], [0, 0, 1, 0], [], []>} : vector<8x32xbf16>, vector<8x32xbf16>, vector<8x8xf32> -> vector<8x8xf32>
    %c0_3 = arith.constant 0 : index
    %c0_4 = arith.constant 0 : index
    %3 = vector.load %arg4[%c0_3, %c0_4] : memref<16x32xbf16, #tpu.memory_space<vmem>>, vector<16x32xbf16>
    %cst_5 = arith.constant dense<0.000000e+00> : vector<8x16xf32>
    %4 = tpu.matmul %0, %3, %cst_5 {dimension_numbers = #tpu.dot_dimension_numbers<[1], [1], [0], [0], [0, 0, 1, 0], [], []>} : vector<8x32xbf16>, vector<16x32xbf16>, vector<8x16xf32> -> vector<8x16xf32>
    %c0_6 = arith.constant 0 : index
    %c0_7 = arith.constant 0 : index
    %5 = vector.load %arg5[%c0_6, %c0_7] : memref<8x8xf32, #tpu.memory_space<vmem>>, vector<8x4xf32>
    %c0_8 = arith.constant 0 : index
    %c4 = arith.constant 4 : index
    %6 = vector.load %arg5[%c0_8, %c4] : memref<8x8xf32, #tpu.memory_space<vmem>>, vector<8x4xf32>
    %7 = vector.extract_strided_slice %2 {offsets = [0, 0], sizes = [8, 4], strides = [1, 1]} : vector<8x8xf32> to vector<8x4xf32>
    %8 = vector.extract_strided_slice %2 {offsets = [0, 4], sizes = [8, 4], strides = [1, 1]} : vector<8x8xf32> to vector<8x4xf32>
    %9 = vector.extract_strided_slice %4 {offsets = [0, 0], sizes = [8, 8], strides = [1, 1]} : vector<8x16xf32> to vector<8x8xf32>
    %10 = vector.extract_strided_slice %4 {offsets = [0, 8], sizes = [8, 8], strides = [1, 1]} : vector<8x16xf32> to vector<8x8xf32>
    %11 = vector.extract_strided_slice %9 {offsets = [0, 0], sizes = [8, 4], strides = [1, 1]} : vector<8x8xf32> to vector<8x4xf32>
    %12 = vector.extract_strided_slice %9 {offsets = [0, 4], sizes = [8, 4], strides = [1, 1]} : vector<8x8xf32> to vector<8x4xf32>
    %13 = arith.mulf %7, %5 : vector<8x4xf32>
    %14 = arith.mulf %8, %6 : vector<8x4xf32>
    %15 = arith.subf %13, %14 : vector<8x4xf32>
    %16 = arith.mulf %8, %5 : vector<8x4xf32>
    %17 = arith.mulf %7, %6 : vector<8x4xf32>
    %18 = arith.addf %16, %17 : vector<8x4xf32>
    %19 = tpu.concatenate %15, %18 in 1 : vector<8x4xf32>, vector<8x4xf32> -> vector<8x8xf32>
    %cst_9 = arith.constant 0.353553385 : f32
    %20 = vector.broadcast %cst_9 : f32 to vector<8x8xf32>
    %21 = arith.mulf %19, %20 : vector<8x8xf32>
    %22 = arith.mulf %11, %5 : vector<8x4xf32>
    %23 = arith.mulf %12, %6 : vector<8x4xf32>
    %24 = arith.subf %22, %23 : vector<8x4xf32>
    %25 = arith.mulf %12, %5 : vector<8x4xf32>
    %26 = arith.mulf %11, %6 : vector<8x4xf32>
    %27 = arith.addf %25, %26 : vector<8x4xf32>
    %28 = tpu.concatenate %24, %27 in 1 : vector<8x4xf32>, vector<8x4xf32> -> vector<8x8xf32>
    %29 = arith.truncf %21 : vector<8x8xf32> to vector<8x8xbf16>
    %c0_10 = arith.constant 0 : index
    %c0_11 = arith.constant 0 : index
    %c0_12 = arith.constant 0 : index
    %30 = vector.load %arg6[%c0_10, %c0_11, %c0_12] : memref<1x8x8xbf16, #tpu.memory_space<vmem>>, vector<1x8x8xbf16>
    %31 = vector.shape_cast %30 : vector<1x8x8xbf16> to vector<8x8xbf16>
    %32 = vector.shape_cast %29 : vector<8x8xbf16> to vector<1x8x8xbf16>
    tpu.vector_store %arg6[%c0_10, %c0_11, %c0_12], %32 {strides = array<i32>} : memref<1x8x8xbf16, #tpu.memory_space<vmem>>, vector<1x8x8xbf16>,
    %33 = arith.truncf %28 : vector<8x8xf32> to vector<8x8xbf16>
    %c0_13 = arith.constant 0 : index
    %c0_14 = arith.constant 0 : index
    %c0_15 = arith.constant 0 : index
    %34 = vector.load %arg7[%c0_13, %c0_14, %c0_15] : memref<1x8x8xbf16, #tpu.memory_space<vmem>>, vector<1x8x8xbf16>
    %35 = vector.shape_cast %34 : vector<1x8x8xbf16> to vector<8x8xbf16>
    %36 = vector.shape_cast %33 : vector<8x8xbf16> to vector<1x8x8xbf16>
    tpu.vector_store %arg7[%c0_13, %c0_14, %c0_15], %36 {strides = array<i32>} : memref<1x8x8xbf16, #tpu.memory_space<vmem>>, vector<1x8x8xbf16>,
    %37 = arith.truncf %10 : vector<8x8xf32> to vector<8x8xbf16>
    %c0_16 = arith.constant 0 : index
    %c0_17 = arith.constant 0 : index
    %c0_18 = arith.constant 0 : index
    %38 = vector.load %arg8[%c0_16, %c0_17, %c0_18] : memref<1x8x8xbf16, #tpu.memory_space<vmem>>, vector<1x8x8xbf16>
    %39 = vector.shape_cast %38 : vector<1x8x8xbf16> to vector<8x8xbf16>
    %40 = vector.shape_cast %37 : vector<8x8xbf16> to vector<1x8x8xbf16>
    tpu.vector_store %arg8[%c0_16, %c0_17, %c0_18], %40 {strides = array<i32>} : memref<1x8x8xbf16, #tpu.memory_space<vmem>>, vector<1x8x8xbf16>,
    return
  }
  func.func @transform_0(%arg0: i32, %arg1: i32) -> (i32, i32) {
    %c0_i32 = arith.constant 0 : i32
    %c0_i32_0 = arith.constant 0 : i32
    return %arg0, %c0_i32 : i32, i32
  }
  func.func @transform_1(%arg0: i32, %arg1: i32) -> (i32, i32) {
    %c0_i32 = arith.constant 0 : i32
    %c0_i32_0 = arith.constant 0 : i32
    return %arg1, %c0_i32 : i32, i32
  }
  func.func @transform_2(%arg0: i32, %arg1: i32) -> (i32, i32) {
    %c0_i32 = arith.constant 0 : i32
    %c0_i32_0 = arith.constant 0 : i32
    return %arg1, %c0_i32 : i32, i32
  }
  func.func @transform_3(%arg0: i32, %arg1: i32) -> (i32, i32) {
    %c0_i32 = arith.constant 0 : i32
    %c0_i32_0 = arith.constant 0 : i32
    return %arg0, %c0_i32 : i32, i32
  }
  func.func @transform_4(%arg0: i32, %arg1: i32) -> (i32, i32, i32) {
    %c0_i32 = arith.constant 0 : i32
    %c0_i32_0 = arith.constant 0 : i32
    return %arg1, %arg0, %c0_i32 : i32, i32, i32
  }
  func.func @transform_5(%arg0: i32, %arg1: i32) -> (i32, i32, i32) {
    %c0_i32 = arith.constant 0 : i32
    %c0_i32_0 = arith.constant 0 : i32
    return %arg1, %arg0, %c0_i32 : i32, i32, i32
  }
  func.func @transform_6(%arg0: i32, %arg1: i32) -> (i32, i32, i32) {
    %c0_i32 = arith.constant 0 : i32
    %c0_i32_0 = arith.constant 0 : i32
    return %arg1, %arg0, %c0_i32 : i32, i32, i32
  }
}

</mosaic_0001>

<llo_original>
// kernel: tpu_custom_call.1
$region0: #{tpu_custom_call.1}
  #allocation0 [shape = 'u32[]', space=smem, size = 0x4, offset = 0x4, fixed_abs, tag = 'smem constant byte address 0x4 - core index']
  #allocation1 [shape = 'u32[144,128]{1,0:T(1,128)}', space=vmem, size = 0x12000, scoped, tag = 'internal scratch']
  %s0 = inlined_call_operand.vmem [shape: bf16[16,32], index: 0, kind: input, shape index: {}]
  %s1 = inlined_call_operand.vmem [shape: bf16[32,32], index: 1, kind: input, shape index: {}]
  %s2 = inlined_call_operand.vmem [shape: bf16[64,32], index: 2, kind: input, shape index: {}]
  %s3 = inlined_call_operand.vmem [shape: f32[16,8], index: 3, kind: input, shape index: {}]
  %s4 = inlined_call_operand.vmem [shape: bf16[4,16,8], index: 4, kind: output, shape index: {0}]
  %s5 = inlined_call_operand.vmem [shape: bf16[4,16,8], index: 5, kind: output, shape index: {1}]
  %s6 = inlined_call_operand.vmem [shape: bf16[4,16,8], index: 6, kind: output, shape index: {2}]
  %7 = xla_tuple %s4, %s5, %s6
  %s8 = sld [smem:[#allocation0]]
  $region65: #{tpu_custom_call.1} parent=0
    _
  %s10 = ssub.s32 1, %s8
  %s11 = scalar_select 0, %s10, %s8
  loop: start=0, step=1, limit=10
  $region2: #{tpu_custom_call.1} parent=0 // loop_pre_header
    _
  $region3: #{tpu_custom_call.1} parent=0 // loop_header
    %s13 = sphi 0, %s17
    %p14 = scmp.ge.s32.totalorder %s13, 10
    %s20 = sphi 0, %s32
    %s21 = sphi 0, %s28
    %s22 = sphi 0, %s20
    %s23 = sphi 0, %s21
    %s24 = sphi 0, %s22
    %s25 = sphi 0, %s23
    %s35 = sphi 0, %s37
    %s38 = sphi 0, %s35
    %s39 = sphi 0, %s38
    %s55 = sphi 0, %s39
    %s61 = sphi 0, %s63
    %s64 = sphi 0, %s61
    %s65 = sphi 0, %s64
    %s81 = sphi 0, %s65
    %s87 = sphi 0, %s89
    %s90 = sphi 0, %s87
    %s91 = sphi 0, %s90
    %s107 = sphi 0, %s91
    %s113 = sphi 0, %s115
    %s116 = sphi 0, %s113
    %s117 = sphi 0, %s116
    %s133 = sphi 0, %s117
    %s141 = sphi 0, %s143
    %s144 = sphi 0, %s141
    %s145 = sphi 0, %s144
    %s161 = sphi 0, %s145
    %s169 = sphi 0, %s171
    %s172 = sphi 0, %s169
    %s173 = sphi 0, %s172
    %s189 = sphi 0, %s173
    %s197 = sphi 0, %s199
    %s200 = sphi 0, %s197
    %s201 = sphi 0, %s200
    %s217 = sphi 0, %s201
  $region4: #{tpu_custom_call.1} parent=0 // loop_header_branch
    %16 = sbr.rel (%p14) target = $region8
  $region5: #{tpu_custom_call.1} parent=0 // loop_body
    %s18 = ssub.s32 %s13, 1
    %s19 = ssub.s32 %s13, 2
    %s26 = sadd.s32 1, %s21
    %p27 = scmp.ge.s32.totalorder %s26, 4
    %s28 = scalar_select %p27, 0, %s26
    %s29 = sadd.s32 1, %s20
    %s30 = scalar_select %p27, %s29, %s20
    %p31 = scmp.ge.s32.totalorder %s30, 2
    %s32 = scalar_select %p31, 0, %s30
    %s33 = ssub.s32 %s20, %s32
    %p34 = scmp.eq.s32.totalorder %s33, 0
    %s36 = sadd.s32 %s35, 1
    %s37 = scalar_select %p34, %s35, %s36
    %p40 = pneg %p34
    %p41 = scmp.eq.s32.totalorder %s13, 7
    %p42 = por %p40, %p41
    %p43 = scmp.ne.s32.totalorder %s35, %s38
    %p44 = scmp.eq.s32.totalorder %s13, 0
    %p45 = por %p43, %p44
    %p46 = scmp.ne.s32.totalorder %s35, %s38
    %p47 = scmp.eq.s32.totalorder %s18, 7
    %p48 = por %p46, %p47
    %p49 = scmp.ne.s32.totalorder %s38, %s39
    %p50 = scmp.eq.s32.totalorder %s18, 0
    %p51 = por %p49, %p50
    %p52 = scmp.ne.s32.totalorder %s38, %s39
    %p53 = scmp.eq.s32.totalorder %s19, 7
    %p54 = por %p52, %p53
    %p56 = scmp.ne.s32.totalorder %s39, %s55
    %p57 = scmp.eq.s32.totalorder %s19, 0
    %p58 = por %p56, %p57
    %s59 = ssub.s32 %s21, %s28
    %p60 = scmp.eq.s32.totalorder %s59, 0
    %s62 = sadd.s32 %s61, 1
    %s63 = scalar_select %p60, %s61, %s62
    %p66 = pneg %p60
    %p67 = scmp.eq.s32.totalorder %s13, 7
    %p68 = por %p66, %p67
    %p69 = scmp.ne.s32.totalorder %s61, %s64
    %p70 = scmp.eq.s32.totalorder %s13, 0
    %p71 = por %p69, %p70
    %p72 = scmp.ne.s32.totalorder %s61, %s64
    %p73 = scmp.eq.s32.totalorder %s18, 7
    %p74 = por %p72, %p73
    %p75 = scmp.ne.s32.totalorder %s64, %s65
    %p76 = scmp.eq.s32.totalorder %s18, 0
    %p77 = por %p75, %p76
    %p78 = scmp.ne.s32.totalorder %s64, %s65
    %p79 = scmp.eq.s32.totalorder %s19, 7
    %p80 = por %p78, %p79
    %p82 = scmp.ne.s32.totalorder %s65, %s81
    %p83 = scmp.eq.s32.totalorder %s19, 0
    %p84 = por %p82, %p83
    %s85 = ssub.s32 %s21, %s28
    %p86 = scmp.eq.s32.totalorder %s85, 0
    %s88 = sadd.s32 %s87, 1
    %s89 = scalar_select %p86, %s87, %s88
    %p92 = pneg %p86
    %p93 = scmp.eq.s32.totalorder %s13, 7
    %p94 = por %p92, %p93
    %p95 = scmp.ne.s32.totalorder %s87, %s90
    %p96 = scmp.eq.s32.totalorder %s13, 0
    %p97 = por %p95, %p96
    %p98 = scmp.ne.s32.totalorder %s87, %s90
    %p99 = scmp.eq.s32.totalorder %s18, 7
    %p100 = por %p98, %p99
    %p101 = scmp.ne.s32.totalorder %s90, %s91
    %p102 = scmp.eq.s32.totalorder %s18, 0
    %p103 = por %p101, %p102
    %p104 = scmp.ne.s32.totalorder %s90, %s91
    %p105 = scmp.eq.s32.totalorder %s19, 7
    %p106 = por %p104, %p105
    %p108 = scmp.ne.s32.totalorder %s91, %s107
    %p109 = scmp.eq.s32.totalorder %s19, 0
    %p110 = por %p108, %p109
    %s111 = ssub.s32 %s20, %s32
    %p112 = scmp.eq.s32.totalorder %s111, 0
    %s114 = sadd.s32 %s113, 1
    %s115 = scalar_select %p112, %s113, %s114
    %p118 = pneg %p112
    %p119 = scmp.eq.s32.totalorder %s13, 7
    %p120 = por %p118, %p119
    %p121 = scmp.ne.s32.totalorder %s113, %s116
    %p122 = scmp.eq.s32.totalorder %s13, 0
    %p123 = por %p121, %p122
    %p124 = scmp.ne.s32.totalorder %s113, %s116
    %p125 = scmp.eq.s32.totalorder %s18, 7
    %p126 = por %p124, %p125
    %p127 = scmp.ne.s32.totalorder %s116, %s117
    %p128 = scmp.eq.s32.totalorder %s18, 0
    %p129 = por %p127, %p128
    %p130 = scmp.ne.s32.totalorder %s116, %s117
    %p131 = scmp.eq.s32.totalorder %s19, 7
    %p132 = por %p130, %p131
    %p134 = scmp.ne.s32.totalorder %s117, %s133
    %p135 = scmp.eq.s32.totalorder %s19, 0
    %p136 = por %p134, %p135
    %s137 = ssub.s32 %s21, %s28
    %s138 = ssub.s32 %s20, %s32
    %s139 = sor.u32 %s137, %s138
    %p140 = scmp.eq.s32.totalorder %s139, 0
    %s142 = sadd.s32 %s141, 1
    %s143 = scalar_select %p140, %s141, %s142
    %p146 = pneg %p140
    %p147 = scmp.eq.s32.totalorder %s13, 7
    %p148 = por %p146, %p147
    %p149 = scmp.ne.s32.totalorder %s141, %s144
    %p150 = scmp.eq.s32.totalorder %s13, 0
    %p151 = por %p149, %p150
    %p152 = scmp.ne.s32.totalorder %s141, %s144
    %p153 = scmp.eq.s32.totalorder %s18, 7
    %p154 = por %p152, %p153
    %p155 = scmp.ne.s32.totalorder %s144, %s145
    %p156 = scmp.eq.s32.totalorder %s18, 0
    %p157 = por %p155, %p156
    %p158 = scmp.ne.s32.totalorder %s144, %s145
    %p159 = scmp.eq.s32.totalorder %s19, 7
    %p160 = por %p158, %p159
    %p162 = scmp.ne.s32.totalorder %s145, %s161
    %p163 = scmp.eq.s32.totalorder %s19, 0
    %p164 = por %p162, %p163
    %s165 = ssub.s32 %s21, %s28
    %s166 = ssub.s32 %s20, %s32
    %s167 = sor.u32 %s165, %s166
    %p168 = scmp.eq.s32.totalorder %s167, 0
    %s170 = sadd.s32 %s169, 1
    %s171 = scalar_select %p168, %s169, %s170
    %p174 = pneg %p168
    %p175 = scmp.eq.s32.totalorder %s13, 7
    %p176 = por %p174, %p175
    %p177 = scmp.ne.s32.totalorder %s169, %s172
    %p178 = scmp.eq.s32.totalorder %s13, 0
    %p179 = por %p177, %p178
    %p180 = scmp.ne.s32.totalorder %s169, %s172
    %p181 = scmp.eq.s32.totalorder %s18, 7
    %p182 = por %p180, %p181
    %p183 = scmp.ne.s32.totalorder %s172, %s173
    %p184 = scmp.eq.s32.totalorder %s18, 0
    %p185 = por %p183, %p184
    %p186 = scmp.ne.s32.totalorder %s172, %s173
    %p187 = scmp.eq.s32.totalorder %s19, 7
    %p188 = por %p186, %p187
    %p190 = scmp.ne.s32.totalorder %s173, %s189
    %p191 = scmp.eq.s32.totalorder %s19, 0
    %p192 = por %p190, %p191
    %s193 = ssub.s32 %s21, %s28
    %s194 = ssub.s32 %s20, %s32
    %s195 = sor.u32 %s193, %s194
    %p196 = scmp.eq.s32.totalorder %s195, 0
    %s198 = sadd.s32 %s197, 1
    %s199 = scalar_select %p196, %s197, %s198
    %p202 = pneg %p196
    %p203 = scmp.eq.s32.totalorder %s13, 7
    %p204 = por %p202, %p203
    %p205 = scmp.ne.s32.totalorder %s197, %s200
    %p206 = scmp.eq.s32.totalorder %s13, 0
    %p207 = por %p205, %p206
    %p208 = scmp.ne.s32.totalorder %s197, %s200
    %p209 = scmp.eq.s32.totalorder %s18, 7
    %p210 = por %p208, %p209
    %p211 = scmp.ne.s32.totalorder %s200, %s201
    %p212 = scmp.eq.s32.totalorder %s18, 0
    %p213 = por %p211, %p212
    %p214 = scmp.ne.s32.totalorder %s200, %s201
    %p215 = scmp.eq.s32.totalorder %s19, 7
    %p216 = por %p214, %p215
    %p218 = scmp.ne.s32.totalorder %s201, %s217
    %p219 = scmp.eq.s32.totalorder %s19, 0
    %p220 = por %p218, %p219
    %p221 = scmp.le.s32.totalorder 1, %s13
    %p222 = scmp.lt.s32.totalorder %s13, 9
    %p223 = pnand %p221, %p222
    %p224 = pneg %p223
    // Predicated region
    $region9: #{tpu_custom_call.1} parent=5 // pred_check
      _
    $region10: #{tpu_custom_call.1} parent=5 // pred_check_branch
      %226 = sbr.rel (%p223) target = $region12
    $region11: #{tpu_custom_call.1} parent=5 // pred_region
      %s227 = ssub.s32 %s13, 1
    $region12: #{tpu_custom_call.1} parent=5 // pred_fallthru
      _
    %p228 = scmp.lt.s32.totalorder %s13, 8
    // Predicated region
    $region13: #{tpu_custom_call.1} parent=5 // pred_check
      %p229 = pneg %p228
    $region14: #{tpu_custom_call.1} parent=5 // pred_check_branch
      %231 = sbr.rel (%p229) target = $region16
    $region15: #{tpu_custom_call.1} parent=5 // pred_region
      // Predicated region
      $region17: #{tpu_custom_call.1} parent=15 // pred_check
        %p232 = pneg %p45
      $region18: #{tpu_custom_call.1} parent=15 // pred_check_branch
        %234 = sbr.rel (%p232) target = $region20
      $region19: #{tpu_custom_call.1} parent=15 // pred_region
        %p235 = scmp.lt.s32.totalorder %s20, 1
        %s236 = scalar_select %p235, %s20, 1
        %s237 = smul.addr %s236, 4
        %s238 = scalar_lea.vmem %s0, %s237
      $region20: #{tpu_custom_call.1} parent=15 // pred_fallthru
        _
      // Predicated region
      $region21: #{tpu_custom_call.1} parent=15 // pred_check
        %p239 = pneg %p71
      $region22: #{tpu_custom_call.1} parent=15 // pred_check_branch
        %241 = sbr.rel (%p239) target = $region24
      $region23: #{tpu_custom_call.1} parent=15 // pred_region
        %p242 = scmp.lt.s32.totalorder %s21, 3
        %s243 = scalar_select %p242, %s21, 3
        %s244 = smul.addr %s243, 4
        %s245 = scalar_lea.vmem %s1, %s244
      $region24: #{tpu_custom_call.1} parent=15 // pred_fallthru
        _
      // Predicated region
      $region25: #{tpu_custom_call.1} parent=15 // pred_check
        %p246 = pneg %p97
      $region26: #{tpu_custom_call.1} parent=15 // pred_check_branch
        %248 = sbr.rel (%p246) target = $region28
      $region27: #{tpu_custom_call.1} parent=15 // pred_region
        %s249 = smul.u32 2, %s21
        %p250 = scmp.lt.s32.totalorder %s249, 7
        %s251 = scalar_select %p250, %s249, 7
        %s252 = smul.addr %s251, 4
        %s253 = scalar_lea.vmem %s2, %s252
        %s254 = smul.u32 2, %s21
      $region28: #{tpu_custom_call.1} parent=15 // pred_fallthru
        _
      // Predicated region
      $region29: #{tpu_custom_call.1} parent=15 // pred_check
        %p255 = pneg %p123
      $region30: #{tpu_custom_call.1} parent=15 // pred_check_branch
        %257 = sbr.rel (%p255) target = $region32
      $region31: #{tpu_custom_call.1} parent=15 // pred_region
        %p258 = scmp.lt.s32.totalorder %s20, 1
        %s259 = scalar_select %p258, %s20, 1
        %s260 = smul.addr %s259, 8
        %s261 = scalar_lea.vmem %s3, %s260
      $region32: #{tpu_custom_call.1} parent=15 // pred_fallthru
        _
    $region16: #{tpu_custom_call.1} parent=5 // pred_fallthru
      _
    %p262 = scmp.le.s32.totalorder 1, %s13
    %p263 = scmp.lt.s32.totalorder %s13, 9
    %p264 = pnand %p262, %p263
    %p265 = pneg %p264
    // Predicated region
    $region33: #{tpu_custom_call.1} parent=5 // pred_check
      _
    $region34: #{tpu_custom_call.1} parent=5 // pred_check_branch
      %267 = sbr.rel (%p264) target = $region36
    $region35: #{tpu_custom_call.1} parent=5 // pred_region
      %s268 = ssub.s32 %s13, 1
      %p269 = scmp.lt.s32.totalorder %s22, 1
      %s270 = scalar_select %p269, %s22, 1
      %s271 = smul.addr %s270, 4
      %s272 = scalar_lea.vmem %s0, %s271
      %p273 = pneg %p51
      %p274 = pneg %p48
      %p275 = scmp.lt.s32.totalorder %s23, 3
      %s276 = scalar_select %p275, %s23, 3
      %s277 = smul.addr %s276, 4
      %s278 = scalar_lea.vmem %s1, %s277
      %p279 = pneg %p77
      %p280 = pneg %p74
      %s281 = smul.u32 2, %s23
      %p282 = scmp.lt.s32.totalorder %s281, 7
      %s283 = scalar_select %p282, %s281, 7
      %s284 = smul.addr %s283, 4
      %s285 = scalar_lea.vmem %s2, %s284
      %p286 = pneg %p103
      %p287 = pneg %p100
      %p288 = scmp.lt.s32.totalorder %s22, 1
      %s289 = scalar_select %p288, %s22, 1
      %s290 = smul.addr %s289, 8
      %s291 = scalar_lea.vmem %s3, %s290
      %p292 = pneg %p129
      %p293 = pneg %p126
      %p294 = pneg %p157
      %p295 = pneg %p154
      %p296 = scmp.lt.s32.totalorder %s23, 3
      %s297 = scalar_select %p296, %s23, 3
      %p298 = scmp.lt.s32.totalorder %s22, 1
      %s299 = scalar_select %p298, %s22, 1
      %s300 = smul.addr %s297, 2
      %s301 = sadd.s32 %s299, %s300
      %s302 = smul.addr %s301, 4
      %s303 = scalar_lea.vmem %s4, %s302
      %p304 = pneg %p185
      %p305 = pneg %p182
      %p306 = scmp.lt.s32.totalorder %s23, 3
      %s307 = scalar_select %p306, %s23, 3
      %p308 = scmp.lt.s32.totalorder %s22, 1
      %s309 = scalar_select %p308, %s22, 1
      %s310 = smul.addr %s307, 2
      %s311 = sadd.s32 %s309, %s310
      %s312 = smul.addr %s311, 4
      %s313 = scalar_lea.vmem %s5, %s312
      %p314 = pneg %p213
      %p315 = pneg %p210
      %p316 = scmp.lt.s32.totalorder %s23, 3
      %s317 = scalar_select %p316, %s23, 3
      %p318 = scmp.lt.s32.totalorder %s22, 1
      %s319 = scalar_select %p318, %s22, 1
      %s320 = smul.addr %s317, 2
      %s321 = sadd.s32 %s319, %s320
      %s322 = smul.addr %s321, 4
      %s323 = scalar_lea.vmem %s6, %s322
      %p324 = scmp.lt.s32.totalorder %s22, 1
      %s325 = scalar_select %p324, %s22, 1
      %s326 = smul.addr %s325, 4
      %s327 = scalar_lea.vmem %s0, %s326
      %p328 = scmp.lt.s32.totalorder %s23, 3
      %s329 = scalar_select %p328, %s23, 3
      %s330 = smul.addr %s329, 4
      %s331 = scalar_lea.vmem %s1, %s330
      %s332 = smul.u32 2, %s23
      %p333 = scmp.lt.s32.totalorder %s332, 7
      %s334 = scalar_select %p333, %s332, 7
      %s335 = smul.addr %s334, 4
      %s336 = scalar_lea.vmem %s2, %s335
      %s337 = smul.u32 2, %s23
      %p338 = scmp.lt.s32.totalorder %s22, 1
      %s339 = scalar_select %p338, %s22, 1
      %s340 = smul.addr %s339, 8
      %s341 = scalar_lea.vmem %s3, %s340
      %p342 = scmp.lt.s32.totalorder %s23, 3
      %s343 = scalar_select %p342, %s23, 3
      %p344 = scmp.lt.s32.totalorder %s22, 1
      %s345 = scalar_select %p344, %s22, 1
      %s346 = smul.addr %s343, 2
      %s347 = sadd.s32 %s345, %s346
      %s348 = smul.addr %s347, 4
      %s349 = scalar_lea.vmem %s4, %s348
      %p350 = scmp.lt.s32.totalorder %s23, 3
      %s351 = scalar_select %p350, %s23, 3
      %p352 = scmp.lt.s32.totalorder %s22, 1
      %s353 = scalar_select %p352, %s22, 1
      %s354 = smul.addr %s351, 2
      %s355 = sadd.s32 %s353, %s354
      %s356 = smul.addr %s355, 4
      %s357 = scalar_lea.vmem %s5, %s356
      %p358 = scmp.lt.s32.totalorder %s23, 3
      %s359 = scalar_select %p358, %s23, 3
      %p360 = scmp.lt.s32.totalorder %s22, 1
      %s361 = scalar_select %p360, %s22, 1
      %s362 = smul.addr %s359, 2
      %s363 = sadd.s32 %s361, %s362
      %s364 = smul.addr %s363, 4
      %s365 = scalar_lea.vmem %s6, %s364
      %v367 = vld [vmem:[%s327] sm:$0xf]
      %v368 = vld [vmem:[%s331] sm:$0xf]
      %vm369 = vcmask 261120
      %v371 = vsel %vm369, %v367, 0
      %v374 = vsel %vm369, %v368, 0
      %376 = vmatprep.subr.bf16.mxu0 0
      %377 = vmatpush1.bf16.xpose.msra.mxu0 %v374
      %378 = vmatprep.subr.bf16.mxu0 0
      %379 = vmatpush1.bf16.xpose.msra.mxu0 0
      %380 = vmatprep.subr.bf16.mxu0 0
      %381 = vmatpush1.bf16.xpose.msra.mxu0 0
      %382 = vmatprep.subr.bf16.mxu0 0
      %383 = vmatpush1.bf16.xpose.msra.mxu0 0
      %384 = vmatprep.subr.bf16.mxu0 0
      %385 = vmatpush1.bf16.xpose.msra.mxu0 0
      %386 = vmatprep.subr.bf16.mxu0 0
      %387 = vmatpush1.bf16.xpose.msra.mxu0 0
      %388 = vmatprep.subr.bf16.mxu0 0
      %389 = vmatpush1.bf16.xpose.msra.mxu0 0
      %390 = vmatprep.subr.bf16.mxu0 0
      %391 = vmatpush1.bf16.xpose.msra.mxu0 0
      %392 = vmatprep.subr.bf16.mxu0 0
      %393 = vmatpush1.bf16.xpose.msra.mxu0 0
      %394 = vmatprep.subr.bf16.mxu0 0
      %395 = vmatpush1.bf16.xpose.msra.mxu0 0
      %396 = vmatprep.subr.bf16.mxu0 0
      %397 = vmatpush1.bf16.xpose.msra.mxu0 0
      %398 = vmatprep.subr.bf16.mxu0 0
      %399 = vmatpush1.bf16.xpose.msra.mxu0 0
      %400 = vmatprep.subr.bf16.mxu0 0
      %401 = vmatpush1.bf16.xpose.msra.mxu0 0
      %402 = vmatprep.subr.bf16.mxu0 0
      %403 = vmatpush1.bf16.xpose.msra.mxu0 0
      %404 = vmatprep.subr.bf16.mxu0 0
      %405 = vmatpush1.bf16.xpose.msra.mxu0 0
      %406 = vmatprep.subr.bf16.mxu0 0
      %407 = vmatpush1.bf16.xpose.msra.mxu0 0
      %408 = vmatprep.mubr.bf16.mxu0 0
      %409 = vmatmul.mubr.bf16.gmra.mrb[0].mxu0 %v371
      %v410 = vpop.f32.mrb[0].mxu0
      %v411 = vadd.f32 0.0, %v410
      %v412 = vpop.f32.mrb[0].mxu0
      %v413 = vpop.f32.mrb[0].mxu0
      %v414 = vpop.f32.mrb[0].mxu0
      %415 = vdwg.mxu0
      %v416 = vld [vmem:[%s336] sm:$0xf]
      %v417 = vld [vmem:[%s336 + $0x4] sm:$0xf]
      %v420 = vunpack.c.l.b16 %v416
      %v421 = vunpack.c.l.b16 %v417
      %v422 = vpack.c.b16 %v421, %v420
      %v424 = vsel %vm369, %v422, 0
      %426 = vmatprep.subr.bf16.mxu0 0
      %427 = vmatpush1.bf16.xpose.msra.mxu0 %v424
      %428 = vmatprep.subr.bf16.mxu0 0
      %429 = vmatpush1.bf16.xpose.msra.mxu0 0
      %430 = vmatprep.subr.bf16.mxu0 0
      %431 = vmatpush1.bf16.xpose.msra.mxu0 0
      %432 = vmatprep.subr.bf16.mxu0 0
      %433 = vmatpush1.bf16.xpose.msra.mxu0 0
      %434 = vmatprep.subr.bf16.mxu0 0
      %435 = vmatpush1.bf16.xpose.msra.mxu0 0
      %436 = vmatprep.subr.bf16.mxu0 0
      %437 = vmatpush1.bf16.xpose.msra.mxu0 0
      %438 = vmatprep.subr.bf16.mxu0 0
      %439 = vmatpush1.bf16.xpose.msra.mxu0 0
      %440 = vmatprep.subr.bf16.mxu0 0
      %441 = vmatpush1.bf16.xpose.msra.mxu0 0
      %442 = vmatprep.subr.bf16.mxu0 0
      %443 = vmatpush1.bf16.xpose.msra.mxu0 0
      %444 = vmatprep.subr.bf16.mxu0 0
      %445 = vmatpush1.bf16.xpose.msra.mxu0 0
      %446 = vmatprep.subr.bf16.mxu0 0
      %447 = vmatpush1.bf16.xpose.msra.mxu0 0
      %448 = vmatprep.subr.bf16.mxu0 0
      %449 = vmatpush1.bf16.xpose.msra.mxu0 0
      %450 = vmatprep.subr.bf16.mxu0 0
      %451 = vmatpush1.bf16.xpose.msra.mxu0 0
      %452 = vmatprep.subr.bf16.mxu0 0
      %453 = vmatpush1.bf16.xpose.msra.mxu0 0
      %454 = vmatprep.subr.bf16.mxu0 0
      %455 = vmatpush1.bf16.xpose.msra.mxu0 0
      %456 = vmatprep.subr.bf16.mxu0 0
      %457 = vmatpush1.bf16.xpose.msra.mxu0 0
      %458 = vmatprep.mubr.bf16.mxu0 0
      %459 = vmatmul.mubr.bf16.gmra.mrb[0].mxu0 %v371
      %v460 = vpop.f32.mrb[0].mxu0
      %v461 = vadd.f32 0.0, %v460
      %v462 = vpop.f32.mrb[0].mxu0
      %v463 = vpop.f32.mrb[0].mxu0
      %v464 = vpop.f32.mrb[0].mxu0
      %465 = vdwg.mxu0
      %v466 = vld [vmem:[%s341] sm:$0xff]
      %v467 = vmul.f32 %v411, %v466
      %469 = vrot.lane.b32.xlu0 %v467, 124
      %v470 = vpop.permute.xlu0 %469
      %v472 = vsub.f32 %v467, %v470
      %474 = vrot.lane.b32.xlu0 %v466, 4
      %v475 = vpop.permute.xlu0 %474
      %v477 = vmul.f32 %v411, %v475
      %478 = vrot.lane.b32.xlu0 %v466, 124
      %v479 = vpop.permute.xlu0 %478
      %v481 = vmul.f32 %v411, %v479
      %483 = vrot.lane.b32.xlu0 %v481, 4
      %v484 = vpop.permute.xlu0 %483
      %v486 = vadd.f32 %v477, %v484
      %vm487 = vcmask 31744
      %v488 = vsel %vm487, %v472, %v486
      %v489 = vmul.f32 %v488, 0.35355338
      %v490 = vmul.f32 %v461, %v466
      %492 = vrot.lane.b32.xlu0 %v490, 124
      %v493 = vpop.permute.xlu0 %492
      %v495 = vsub.f32 %v490, %v493
      %v496 = vmul.f32 %v461, %v475
      %v497 = vmul.f32 %v461, %v479
      %499 = vrot.lane.b32.xlu0 %v497, 4
      %v500 = vpop.permute.xlu0 %499
      %v502 = vadd.f32 %v496, %v500
      %v503 = vsel %vm487, %v495, %v502
      %v504 = vpack.c.bf16 %v489, %v489
      %vm505 = vcmask 60416
      %506 = vst.msk [vmem:[%s349] sm:$0xf] %vm505, %v504
      %v507 = vpack.c.bf16 %v503, %v503
      %508 = vst.msk [vmem:[%s357] sm:$0xf] %vm505, %v507
      %v509 = vpack.c.bf16 %v461, %v461
      %v511 = vunpack.c.l.b16 %v509
      %v512 = vpack.c.b16 %v511, %v511
      %513 = vrot.lane.b32.xlu0 %v512, 120
      %v514 = vpop.permute.xlu0 %513
      %516 = vst.msk [vmem:[%s365] sm:$0xf] %vm505, %v514
      %p517 = scmp.lt.s32.totalorder %s23, 3
      %s518 = scalar_select %p517, %s23, 3
      %p519 = scmp.lt.s32.totalorder %s22, 1
      %s520 = scalar_select %p519, %s22, 1
      %s521 = smul.addr %s518, 2
      %s522 = sadd.s32 %s520, %s521
      %s523 = smul.addr %s522, 4
      %s524 = scalar_lea.vmem %s4, %s523
      %p525 = scmp.lt.s32.totalorder %s23, 3
      %s526 = scalar_select %p525, %s23, 3
      %p527 = scmp.lt.s32.totalorder %s22, 1
      %s528 = scalar_select %p527, %s22, 1
      %s529 = smul.addr %s526, 2
      %s530 = sadd.s32 %s528, %s529
      %s531 = smul.addr %s530, 4
      %s532 = scalar_lea.vmem %s5, %s531
      %p533 = scmp.lt.s32.totalorder %s23, 3
      %s534 = scalar_select %p533, %s23, 3
      %p535 = scmp.lt.s32.totalorder %s22, 1
      %s536 = scalar_select %p535, %s22, 1
      %s537 = smul.addr %s534, 2
      %s538 = sadd.s32 %s536, %s537
      %s539 = smul.addr %s538, 4
      %s540 = scalar_lea.vmem %s6, %s539
      // Predicated region
      $region37: #{tpu_custom_call.1} parent=35 // pred_check
        %p541 = pneg %p154
      $region38: #{tpu_custom_call.1} parent=35 // pred_check_branch
        %543 = sbr.rel (%p541) target = $region40
      $region39: #{tpu_custom_call.1} parent=35 // pred_region
        _
      $region40: #{tpu_custom_call.1} parent=35 // pred_fallthru
        _
      // Predicated region
      $region41: #{tpu_custom_call.1} parent=35 // pred_check
        %p544 = pneg %p182
      $region42: #{tpu_custom_call.1} parent=35 // pred_check_branch
        %546 = sbr.rel (%p544) target = $region44
      $region43: #{tpu_custom_call.1} parent=35 // pred_region
        _
      $region44: #{tpu_custom_call.1} parent=35 // pred_fallthru
        _
      // Predicated region
      $region45: #{tpu_custom_call.1} parent=35 // pred_check
        %p547 = pneg %p210
      $region46: #{tpu_custom_call.1} parent=35 // pred_check_branch
        %549 = sbr.rel (%p547) target = $region48
      $region47: #{tpu_custom_call.1} parent=35 // pred_region
        _
      $region48: #{tpu_custom_call.1} parent=35 // pred_fallthru
        _
    $region36: #{tpu_custom_call.1} parent=5 // pred_fallthru
      _
    %p550 = scmp.le.s32.totalorder 2, %s13
    // Predicated region
    $region49: #{tpu_custom_call.1} parent=5 // pred_check
      %p551 = pneg %p550
    $region50: #{tpu_custom_call.1} parent=5 // pred_check_branch
      %553 = sbr.rel (%p551) target = $region52
    $region51: #{tpu_custom_call.1} parent=5 // pred_region
      %s554 = ssub.s32 %s13, 2
      // Predicated region
      $region53: #{tpu_custom_call.1} parent=51 // pred_check
        %p555 = pneg %p160
      $region54: #{tpu_custom_call.1} parent=51 // pred_check_branch
        %557 = sbr.rel (%p555) target = $region56
      $region55: #{tpu_custom_call.1} parent=51 // pred_region
        %p558 = scmp.lt.s32.totalorder %s25, 3
        %s559 = scalar_select %p558, %s25, 3
        %p560 = scmp.lt.s32.totalorder %s24, 1
        %s561 = scalar_select %p560, %s24, 1
        %s562 = smul.addr %s559, 2
        %s563 = sadd.s32 %s561, %s562
        %s564 = smul.addr %s563, 4
        %s565 = scalar_lea.vmem %s4, %s564
      $region56: #{tpu_custom_call.1} parent=51 // pred_fallthru
        _
      // Predicated region
      $region57: #{tpu_custom_call.1} parent=51 // pred_check
        %p566 = pneg %p188
      $region58: #{tpu_custom_call.1} parent=51 // pred_check_branch
        %568 = sbr.rel (%p566) target = $region60
      $region59: #{tpu_custom_call.1} parent=51 // pred_region
        %p569 = scmp.lt.s32.totalorder %s25, 3
        %s570 = scalar_select %p569, %s25, 3
        %p571 = scmp.lt.s32.totalorder %s24, 1
        %s572 = scalar_select %p571, %s24, 1
        %s573 = smul.addr %s570, 2
        %s574 = sadd.s32 %s572, %s573
        %s575 = smul.addr %s574, 4
        %s576 = scalar_lea.vmem %s5, %s575
      $region60: #{tpu_custom_call.1} parent=51 // pred_fallthru
        _
      // Predicated region
      $region61: #{tpu_custom_call.1} parent=51 // pred_check
        %p577 = pneg %p216
      $region62: #{tpu_custom_call.1} parent=51 // pred_check_branch
        %579 = sbr.rel (%p577) target = $region64
      $region63: #{tpu_custom_call.1} parent=51 // pred_region
        %p580 = scmp.lt.s32.totalorder %s25, 3
        %s581 = scalar_select %p580, %s25, 3
        %p582 = scmp.lt.s32.totalorder %s24, 1
        %s583 = scalar_select %p582, %s24, 1
        %s584 = smul.addr %s581, 2
        %s585 = sadd.s32 %s583, %s584
        %s586 = smul.addr %s585, 4
        %s587 = scalar_lea.vmem %s6, %s586
      $region64: #{tpu_custom_call.1} parent=51 // pred_fallthru
        _
    $region52: #{tpu_custom_call.1} parent=5 // pred_fallthru
      _
  $region6: #{tpu_custom_call.1} parent=0 // loop_footer
    %s17 = sadd.s32 1, %s13
  $region7: #{tpu_custom_call.1} parent=0 // loop_footer_branch
    %12 = sbr.rel target = $region3
  $region8: #{tpu_custom_call.1} parent=0 // loop_exit
    _

</llo_original>
